<compile_context>
chip_gen: v7x
topology: tpu7x:2x2x1
jax: 0.10.0
libtpu: 0.0.40
codegen_flags: <defaults>
</compile_context>

<pallas_src>
import functools

import jax
import jax.numpy as jnp
from jax import lax
from jax.experimental import pallas as pl
from jax.experimental.pallas import tpu as pltpu


_LANE = 128
_P_TILE_MAX = 2048          # per-step feature tile along the spatial (c*d) axis


# ----------------------------------------------------------------------------
# Small helpers (host side).
# ----------------------------------------------------------------------------
def _round_up(x, m):
    return (x + m - 1) // m * m


def _choose_p_tile(P):
    """Lane-aligned spatial tile size and padded spatial extent."""
    p_pad = _round_up(max(P, _LANE), _LANE)
    if p_pad <= _P_TILE_MAX:
        return p_pad, p_pad
    p_tile = _P_TILE_MAX
    return p_tile, _round_up(p_pad, p_tile)


def _pad_last(x, new_size):
    pad = new_size - x.shape[-1]
    if pad == 0:
        return x
    cfg = [(0, 0)] * (x.ndim - 1) + [(0, pad)]
    return jnp.pad(x, cfg)          # zero padding contributes 0 to the Gram


def _vmem_limit_bytes(N, p_tile):
    n_sub = max(_round_up(N, 8), 8)
    n_lane = max(_round_up(N, _LANE), _LANE)
    est = (2 * N * p_tile * 4          # double-buffered feature tile
           + 2 * p_tile * 4            # double-buffered mask tile
           + 6 * n_sub * n_lane * 4    # target / Gram / partial-loss / acc (padded)
           + (2 << 20))                # headroom
    return int(min(max(est, 16 << 20), 64 << 20))


def _feature_matrix(input_nchw):
    a, b, c, d = input_nchw.shape
    assert a == 1, "PyTorch broadcast in masked_gram_matrix requires batch == 1"
    return input_nchw.reshape(a * b, c * d).astype(jnp.float32)


def prepare_masks(masks, c, d):
    """Resize masks to (c, d), min-max normalize per mask (no EPS — faithful to
    PyTorch), and fold sqrt(1 / (sum(mask) * k)) into the mask so the kernel's
    Gram needs no per-step normalization.  Returns (k, c*d) float32."""
    a, k = masks.shape[:2]
    assert a == 1, "PyTorch broadcast in masked_gram_matrix requires batch == 1"
    P = c * d
    # Glue: bilinear interpolation, half-pixel centers, no antialias — matches
    # F.interpolate(mode='bilinear', align_corners=False).
    m = jax.image.resize(masks.astype(jnp.float32), (a, k, c, d),
                         method="bilinear", antialias=False)
    m = m.reshape(k, P)
    m_min = jnp.min(m, axis=1, keepdims=True)
    m_max = jnp.max(m, axis=1, keepdims=True)
    m_norm = (m - m_min) / (m_max - m_min)          # no EPS (PyTorch-faithful)
    num = jnp.sum(m_norm, axis=1, keepdims=True)    # per-mask normalizer
    scale = 1.0 / (num * k)                         # folds g/num and G/k
    return m_norm * jnp.sqrt(scale)                 # (k, P)


# ----------------------------------------------------------------------------
# Kernels.  Grid = (k masks, P tiles).  The P axis is the reduction axis
# ("arbitrary"), the mask axis is independent ("parallel", v7x megacore).
#   feat_ref : (N, P_TILE)       f32   feature tile (streamed over P)
#   mask_ref : (1, 1, P_TILE)    f32   pre-normalized, sqrt-scaled mask tile
#   acc_ref  : (N, N)            f32   VMEM Gram accumulator scratch
# ----------------------------------------------------------------------------
def _accumulate_gram(feat_ref, mask_ref, acc_ref, compute_dtype):
    p = pl.program_id(1)

    @pl.when(p == 0)
    def _init():
        acc_ref[...] = jnp.zeros_like(acc_ref)

    w = (feat_ref[...] * mask_ref[0]).astype(compute_dtype)   # (N, P_TILE)
    # Contract the spatial axis of w with itself directly (no w.T transpose);
    # MXU matmul with f32 accumulation.
    acc_ref[...] += lax.dot_general(
        w, w, dimension_numbers=(((1,), (1,)), ((), ())),
        preferred_element_type=jnp.float32)


def _gram_kernel(feat_ref, mask_ref, g_ref, acc_ref, *, compute_dtype):
    """Writes the per-mask Gram (used once, to build the target)."""
    _accumulate_gram(feat_ref, mask_ref, acc_ref, compute_dtype)

    @pl.when(pl.program_id(1) == pl.num_programs(1) - 1)
    def _store():
        g_ref[0] = acc_ref[...].astype(g_ref.dtype)


def _loss_kernel(feat_ref, mask_ref, target_ref, loss_ref, acc_ref, *, compute_dtype):
    """Loss-only path: the Gram never leaves VMEM; only a per-mask partial
    squared error (lane-padded) is written back."""
    _accumulate_gram(feat_ref, mask_ref, acc_ref, compute_dtype)

    @pl.when(pl.program_id(1) == pl.num_programs(1) - 1)
    def _finalize():
        diff = acc_ref[...] - target_ref[0]
        sq = jnp.sum(diff * diff)
        loss_ref[...] = jnp.zeros_like(loss_ref) + sq


# ----------------------------------------------------------------------------
# pallas_call wrappers.
# ----------------------------------------------------------------------------
def masked_gram_pallas(input_nchw, masks_scaled, *, compute_dtype=jnp.float32):
    """Per-mask Gram matrices, shape (k, a*b, a*b)."""
    feats = _feature_matrix(input_nchw)
    N, P = feats.shape
    k = masks_scaled.shape[0]
    p_tile, p_pad = _choose_p_tile(P)
    feats = _pad_last(feats, p_pad)
    masks3 = _pad_last(masks_scaled.astype(jnp.float32), p_pad).reshape(k, 1, p_pad)
    n_p = p_pad // p_tile

    kernel = functools.partial(_gram_kernel, compute_dtype=compute_dtype)
    return pl.pallas_call(
        kernel,
        out_shape=jax.ShapeDtypeStruct((k, N, N), jnp.float32),
        grid_spec=pltpu.PrefetchScalarGridSpec(
            num_scalar_prefetch=0,
            grid=(k, n_p),
            in_specs=[
                pl.BlockSpec((N, p_tile), lambda i, p: (0, p)),      # features
                pl.BlockSpec((1, 1, p_tile), lambda i, p: (i, 0, p)),  # mask i
            ],
            out_specs=pl.BlockSpec((1, N, N), lambda i, p: (i, 0, 0)),
            scratch_shapes=[pltpu.VMEM((N, N), jnp.float32)],
        ),
        compiler_params=pltpu.CompilerParams(
            dimension_semantics=("parallel", "arbitrary"),
            vmem_limit_bytes=_vmem_limit_bytes(N, p_tile),
        ),
    )(feats, masks3)


def color_aware_loss_pallas(input_nchw, masks_scaled, target, *,
                            compute_dtype=jnp.float32):
    """MSE between the per-mask Grams of `input_nchw` and `target`, without
    materializing the Grams in HBM."""
    feats = _feature_matrix(input_nchw)
    N, P = feats.shape
    k = masks_scaled.shape[0]
    assert target.shape == (k, N, N)
    p_tile, p_pad = _choose_p_tile(P)
    feats = _pad_last(feats, p_pad)
    masks3 = _pad_last(masks_scaled.astype(jnp.float32), p_pad).reshape(k, 1, p_pad)
    n_p = p_pad // p_tile

    kernel = functools.partial(_loss_kernel, compute_dtype=compute_dtype)
    partial_sq = pl.pallas_call(
        kernel,
        out_shape=jax.ShapeDtypeStruct((k, 1, _LANE), jnp.float32),
        grid_spec=pltpu.PrefetchScalarGridSpec(
            num_scalar_prefetch=0,
            grid=(k, n_p),
            in_specs=[
                pl.BlockSpec((N, p_tile), lambda i, p: (0, p)),        # features
                pl.BlockSpec((1, 1, p_tile), lambda i, p: (i, 0, p)),  # mask i
                pl.BlockSpec((1, N, N), lambda i, p: (i, 0, 0)),       # target i
            ],
            out_specs=pl.BlockSpec((1, 1, _LANE), lambda i, p: (i, 0, 0)),
            scratch_shapes=[pltpu.VMEM((N, N), jnp.float32)],
        ),
        compiler_params=pltpu.CompilerParams(
            dimension_semantics=("parallel", "arbitrary"),
            vmem_limit_bytes=_vmem_limit_bytes(N, p_tile),
        ),
    )(feats, masks3, target.astype(jnp.float32))

    return jnp.sum(partial_sq[:, 0, 0]) / (k * N * N)


# ----------------------------------------------------------------------------
# Module.
# ----------------------------------------------------------------------------
class ColorAwareLoss:
    """JAX/Pallas port of the PyTorch ColorAwareLoss (L2 style-feature distance)."""

    def __init__(self, target_feature, target_masks, *, compute_dtype=jnp.float32):
        self.compute_dtype = compute_dtype
        self.input_masks = target_masks
        self._mask_cache = {}          # (c, d) -> prepared masks (hoisted work)
        _, _, c, d = target_feature.shape
        G_t = masked_gram_pallas(target_feature, self._prepared_masks(c, d),
                                 compute_dtype=compute_dtype)
        self.target = lax.stop_gradient(G_t)    # .detach()
        self.loss = None

    def set_input_masks(self, input_masks):
        self.input_masks = input_masks
        self._mask_cache = {}

    def _prepared_masks(self, c, d):
        key = (c, d)
        if key not in self._mask_cache:
            self._mask_cache[key] = prepare_masks(self.input_masks, c, d)
        return self._mask_cache[key]

    def forward(self, x):
        _, _, c, d = x.shape
        masks_scaled = self._prepared_masks(c, d)
        # TODO(synk): only the default STYLE_FEATURE_DISTANCE == 'L2' branch is
        # implemented; the 'COSINE' branch of the PyTorch module is not ported.
        self.loss = color_aware_loss_pallas(x, masks_scaled, self.target,
                                            compute_dtype=self.compute_dtype)
        return x

    __call__ = forward


# ----------------------------------------------------------------------------
# Pure-JAX reference (same math as the PyTorch module) for a sanity check.
# ----------------------------------------------------------------------------
def _masked_gram_matrix_ref(input_nchw, masks):
    a, b, c, d = input_nchw.shape
    k = masks.shape[1]
    masks_r = jax.image.resize(masks.astype(jnp.float32), (a, k, c, d),
                               method="bilinear", antialias=False)
    feats = input_nchw.reshape(a * b, c * d).astype(jnp.float32)
    rows = []
    for i in range(k):
        mv = masks_r[:, i, :, :].reshape(a, c * d)
        mv = (mv - jnp.min(mv)) / (jnp.max(mv) - jnp.min(mv))
        num = jnp.sum(mv)
        w = feats * mv
        rows.append((w @ w.T) / num)
    return jnp.stack(rows, axis=0) / k


if __name__ == "__main__":
    key = jax.random.PRNGKey(0)
    a, b, c, d = 1, 4, 16, 16          # NCHW feature map (batch must be 1)
    k_masks = 3
    H, W = 8, 8                        # mask resolution before bilinear resize

    k1, k2, k3 = jax.random.split(key, 3)
    target_feature = jax.random.normal(k1, (a, b, c, d), dtype=jnp.float32)
    target_masks = jax.random.uniform(k2, (a, k_masks, H, W), dtype=jnp.float32)
    x = jax.random.normal(k3, (a, b, c, d), dtype=jnp.float32)

    # f32 MXU path (bit-faithful to the PyTorch math).
    loss_mod = ColorAwareLoss(target_feature, target_masks)
    out = loss_mod(x)
    out, loss = jax.block_until_ready((out, loss_mod.loss))

    # forward returns its input unchanged
    assert out.shape == x.shape and bool(jnp.allclose(out, x))

    # sanity check against pure-JAX reference of the PyTorch math
    G_ref_tgt = _masked_gram_matrix_ref(target_feature, target_masks)
    G_ref_in = _masked_gram_matrix_ref(x, target_masks)
    loss_ref = jnp.mean((G_ref_in - G_ref_tgt) ** 2)
    assert bool(jnp.allclose(loss_mod.target, G_ref_tgt, rtol=1e-3, atol=1e-5))
    assert bool(jnp.allclose(loss, loss_ref, rtol=1e-3, atol=1e-6))

    # Optional bf16-MXU fast path (f32 accumulate): looser numerical tolerance.
    loss_mod_bf16 = ColorAwareLoss(target_feature, target_masks,
                                   compute_dtype=jnp.bfloat16)
    _ = loss_mod_bf16(x)
    loss_bf16 = jax.block_until_ready(loss_mod_bf16.loss)
    assert bool(jnp.isfinite(loss_bf16))
    assert bool(jnp.allclose(loss_bf16, loss_ref, rtol=1e-1, atol=1e-4))

    print("KERNEL_OK")
</pallas_src>

<mosaic_0001>
module attributes {stable_mosaic.version = 11 : i64} {
  func.func @_gram_kernel(%arg0: i32, %arg1: i32, %arg2: memref<4x256xf32, #tpu.memory_space<vmem>>, %arg3: memref<1x1x256xf32, #tpu.memory_space<vmem>>, %arg4: memref<1x4x4xf32, #tpu.memory_space<vmem>>, %arg5: memref<4x4xf32, #tpu.memory_space<vmem>>) attributes {dimension_semantics = [#tpu.dimension_semantics<parallel>, #tpu.dimension_semantics<arbitrary>], iteration_bounds = array<i64: 3, 1>, scalar_prefetch = 0 : i64, scratch_operands = 1 : i64, tpu.core_type = #tpu.core_type<tc>, window_params = [{transform_indices = @transform_0, window_bounds = array<i64: 4, 256>}, {transform_indices = @transform_1, window_bounds = array<i64: 1, 1, 256>}, {transform_indices = @transform_2, window_bounds = array<i64: 1, 4, 4>}]} {
    %c0_i32 = arith.constant 0 : i32
    %0 = arith.cmpi eq, %arg1, %c0_i32 : i32
    %1 = arith.extui %0 : i1 to i32
    %c0_i32_0 = arith.constant 0 : i32
    %2 = arith.cmpi ne, %1, %c0_i32_0 : i32
    scf.if %2 {
      %cst_11 = arith.constant 0.000000e+00 : f32
      %15 = vector.broadcast %cst_11 : f32 to vector<4x4xf32>
      %c0_12 = arith.constant 0 : index
      %c0_13 = arith.constant 0 : index
      %16 = vector.load %arg5[%c0_12, %c0_13] : memref<4x4xf32, #tpu.memory_space<vmem>>, vector<4x4xf32>
      tpu.vector_store %arg5[%c0_12, %c0_13], %15 {strides = array<i32>} : memref<4x4xf32, #tpu.memory_space<vmem>>, vector<4x4xf32>,
    } else {
    }
    %c0 = arith.constant 0 : index
    %c0_1 = arith.constant 0 : index
    %3 = vector.load %arg2[%c0, %c0_1] : memref<4x256xf32, #tpu.memory_space<vmem>>, vector<4x256xf32>
    %c0_2 = arith.constant 0 : index
    %c0_3 = arith.constant 0 : index
    %c0_4 = arith.constant 0 : index
    %4 = vector.load %arg3[%c0_2, %c0_3, %c0_4] : memref<1x1x256xf32, #tpu.memory_space<vmem>>, vector<1x1x256xf32>
    %5 = vector.shape_cast %4 : vector<1x1x256xf32> to vector<1x256xf32>
    %6 = vector.broadcast %5 : vector<1x256xf32> to vector<4x256xf32>
    %7 = arith.mulf %3, %6 : vector<4x256xf32>
    %c0_5 = arith.constant 0 : index
    %c0_6 = arith.constant 0 : index
    %8 = vector.load %arg5[%c0_5, %c0_6] : memref<4x4xf32, #tpu.memory_space<vmem>>, vector<4x4xf32>
    %cst = arith.constant dense<0.000000e+00> : vector<4x4xf32>
    %9 = tpu.matmul %7, %7, %cst {dimension_numbers = #tpu.dot_dimension_numbers<[1], [1], [0], [0], [0, 0, 1, 0], [], []>} : vector<4x256xf32>, vector<4x256xf32>, vector<4x4xf32> -> vector<4x4xf32>
    %10 = arith.addf %8, %9 : vector<4x4xf32>
    %c0_7 = arith.constant 0 : index
    %c0_8 = arith.constant 0 : index
    %11 = vector.load %arg5[%c0_7, %c0_8] : memref<4x4xf32, #tpu.memory_space<vmem>>, vector<4x4xf32>
    tpu.vector_store %arg5[%c0_7, %c0_8], %10 {strides = array<i32>} : memref<4x4xf32, #tpu.memory_space<vmem>>, vector<4x4xf32>,
    %c0_i32_9 = arith.constant 0 : i32
    %12 = arith.cmpi eq, %arg1, %c0_i32_9 : i32
    %13 = arith.extui %12 : i1 to i32
    %c0_i32_10 = arith.constant 0 : i32
    %14 = arith.cmpi ne, %13, %c0_i32_10 : i32
    scf.if %14 {
      %c0_11 = arith.constant 0 : index
      %c0_12 = arith.constant 0 : index
      %15 = vector.load %arg5[%c0_11, %c0_12] : memref<4x4xf32, #tpu.memory_space<vmem>>, vector<4x4xf32>
      %c0_13 = arith.constant 0 : index
      %c0_14 = arith.constant 0 : index
      %c0_15 = arith.constant 0 : index
      %16 = vector.load %arg4[%c0_13, %c0_14, %c0_15] : memref<1x4x4xf32, #tpu.memory_space<vmem>>, vector<1x4x4xf32>
      %17 = vector.shape_cast %16 : vector<1x4x4xf32> to vector<4x4xf32>
      %18 = vector.shape_cast %15 : vector<4x4xf32> to vector<1x4x4xf32>
      tpu.vector_store %arg4[%c0_13, %c0_14, %c0_15], %18 {strides = array<i32>} : memref<1x4x4xf32, #tpu.memory_space<vmem>>, vector<1x4x4xf32>,
    } else {
    }
    return
  }
  func.func @transform_0(%arg0: i32, %arg1: i32) -> (i32, i32) {
    %c0_i32 = arith.constant 0 : i32
    %c0_i32_0 = arith.constant 0 : i32
    return %c0_i32, %arg1 : i32, i32
  }
  func.func @transform_1(%arg0: i32, %arg1: i32) -> (i32, i32, i32) {
    %c0_i32 = arith.constant 0 : i32
    %c0_i32_0 = arith.constant 0 : i32
    return %arg0, %c0_i32, %arg1 : i32, i32, i32
  }
  func.func @transform_2(%arg0: i32, %arg1: i32) -> (i32, i32, i32) {
    %c0_i32 = arith.constant 0 : i32
    %c0_i32_0 = arith.constant 0 : i32
    %c0_i32_1 = arith.constant 0 : i32
    return %arg0, %c0_i32, %c0_i32_0 : i32, i32, i32
  }
}

</mosaic_0001>

<llo_original>
// kernel: tpu_custom_call.1
$region0: #{tpu_custom_call.1}
  #allocation0 [shape = 'u32[]', space=smem, size = 0x4, offset = 0x4, fixed_abs, tag = 'smem constant byte address 0x4 - core index']
  #allocation1 [shape = 'u32[144,128]{1,0:T(1,128)}', space=vmem, size = 0x12000, scoped, tag = 'internal scratch']
  #allocation2 [shape = 'f32[4,4]{1,0:T(4,128)}', space=vmem, size = 0x800, scoped, tag = 'scratch operand']
  %s0 = inlined_call_operand.hbm [shape: f32[4,256], index: 0, kind: input, shape index: {}]
  %s1 = inlined_call_operand.hbm [shape: f32[3,1,256], index: 1, kind: input, shape index: {}]
  %s2 = inlined_call_operand.hbm [shape: f32[3,4,4], index: 2, kind: output, shape index: {}]
  %s3 = sld [smem:[#allocation0]]
  $region57: #{tpu_custom_call.1} parent=0
    _
  %s5 = ssub.s32 1, %s3
  %s6 = scalar_select 0, %s5, %s3
  $region1: #{tpu_custom_call.1} parent=0
    #allocation3 [shape = 'u8[4096]{0}', space=vmem, size = 0x1000, scoped, tag = 'input window, operand 0, single buffered']
    #allocation4 [shape = 's32[2]{0}', space=sflag, size = 0x8, scoped, tag = 'scoped memory for tpu_custom_call.1']
    #allocation5 [shape = 's32[2]{0}', space=sflag, size = 0x8, scoped, tag = 'scoped memory for tpu_custom_call.1']
    #allocation6 [shape = 'u8[2048]{0}', space=vmem, size = 0x800, scoped, tag = 'input window, operand 1']
    #allocation7 [shape = 's32[2]{0}', space=sflag, size = 0x8, scoped, tag = 'scoped memory for tpu_custom_call.1']
    #allocation8 [shape = 'u8[4096]{0}', space=vmem, size = 0x1000, scoped, tag = 'output window, operand 0']
    %7 = vsyncpa [#allocation4], 0
    %8 = vsyncpa [#allocation7], 0
    %s9 = scalar_lea.sflag [#allocation7], 1
    %10 = vsyncpa %s9, 0
    %11 = vsyncpa [#allocation5], 0
    %s12 = scalar_lea.sflag [#allocation5], 1
    %13 = vsyncpa %s12, 0
    loop: start=0, step=1, limit=5
    $region2: #{tpu_custom_call.1} parent=1 // loop_pre_header
      _
    $region3: #{tpu_custom_call.1} parent=1 // loop_header
      %s15 = sphi 0, %s19
      %p16 = scmp.ge.s32.totalorder %s15, 5
      %s22 = sphi 0, %s34
      %s23 = sphi 0, %s30
      %s24 = sphi 0, %s22
      %s25 = sphi 0, %s23
      %s26 = sphi 0, %s24
      %s27 = sphi 0, %s25
      %s37 = sphi 0, %s39
      %s40 = sphi 0, %s37
      %s41 = sphi 0, %s40
      %s57 = sphi 0, %s41
      %s65 = sphi 0, %s67
      %s68 = sphi 0, %s65
      %s69 = sphi 0, %s68
      %s85 = sphi 0, %s69
      %s91 = sphi 0, %s93
      %s94 = sphi 0, %s91
      %s95 = sphi 0, %s94
      %s111 = sphi 0, %s95
    $region4: #{tpu_custom_call.1} parent=1 // loop_header_branch
      %18 = sbr.rel (%p16) target = $region8
    $region5: #{tpu_custom_call.1} parent=1 // loop_body
      %s20 = ssub.s32 %s15, 1
      %s21 = ssub.s32 %s15, 2
      %s28 = sadd.s32 1, %s23
      %p29 = scmp.ge.s32.totalorder %s28, 1
      %s30 = scalar_select %p29, 0, %s28
      %s31 = sadd.s32 1, %s22
      %s32 = scalar_select %p29, %s31, %s22
      %p33 = scmp.ge.s32.totalorder %s32, 3
      %s34 = scalar_select %p33, 0, %s32
      %s35 = ssub.s32 %s23, %s30
      %p36 = scmp.eq.s32.totalorder %s35, 0
      %s38 = sadd.s32 %s37, 1
      %s39 = scalar_select %p36, %s37, %s38
      %p42 = pneg %p36
      %p43 = scmp.eq.s32.totalorder %s15, 2
      %p44 = por %p42, %p43
      %p45 = scmp.ne.s32.totalorder %s37, %s40
      %p46 = scmp.eq.s32.totalorder %s15, 0
      %p47 = por %p45, %p46
      %p48 = scmp.ne.s32.totalorder %s37, %s40
      %p49 = scmp.eq.s32.totalorder %s20, 2
      %p50 = por %p48, %p49
      %p51 = scmp.ne.s32.totalorder %s40, %s41
      %p52 = scmp.eq.s32.totalorder %s20, 0
      %p53 = por %p51, %p52
      %p54 = scmp.ne.s32.totalorder %s40, %s41
      %p55 = scmp.eq.s32.totalorder %s21, 2
      %p56 = por %p54, %p55
      %p58 = scmp.ne.s32.totalorder %s41, %s57
      %p59 = scmp.eq.s32.totalorder %s21, 0
      %p60 = por %p58, %p59
      %s61 = ssub.s32 %s22, %s34
      %s62 = ssub.s32 %s23, %s30
      %s63 = sor.u32 %s61, %s62
      %p64 = scmp.eq.s32.totalorder %s63, 0
      %s66 = sadd.s32 %s65, 1
      %s67 = scalar_select %p64, %s65, %s66
      %p70 = pneg %p64
      %p71 = scmp.eq.s32.totalorder %s15, 2
      %p72 = por %p70, %p71
      %p73 = scmp.ne.s32.totalorder %s65, %s68
      %p74 = scmp.eq.s32.totalorder %s15, 0
      %p75 = por %p73, %p74
      %p76 = scmp.ne.s32.totalorder %s65, %s68
      %p77 = scmp.eq.s32.totalorder %s20, 2
      %p78 = por %p76, %p77
      %p79 = scmp.ne.s32.totalorder %s68, %s69
      %p80 = scmp.eq.s32.totalorder %s20, 0
      %p81 = por %p79, %p80
      %p82 = scmp.ne.s32.totalorder %s68, %s69
      %p83 = scmp.eq.s32.totalorder %s21, 2
      %p84 = por %p82, %p83
      %p86 = scmp.ne.s32.totalorder %s69, %s85
      %p87 = scmp.eq.s32.totalorder %s21, 0
      %p88 = por %p86, %p87
      %s89 = ssub.s32 %s22, %s34
      %p90 = scmp.eq.s32.totalorder %s89, 0
      %s92 = sadd.s32 %s91, 1
      %s93 = scalar_select %p90, %s91, %s92
      %p96 = pneg %p90
      %p97 = scmp.eq.s32.totalorder %s15, 2
      %p98 = por %p96, %p97
      %p99 = scmp.ne.s32.totalorder %s91, %s94
      %p100 = scmp.eq.s32.totalorder %s15, 0
      %p101 = por %p99, %p100
      %p102 = scmp.ne.s32.totalorder %s91, %s94
      %p103 = scmp.eq.s32.totalorder %s20, 2
      %p104 = por %p102, %p103
      %p105 = scmp.ne.s32.totalorder %s94, %s95
      %p106 = scmp.eq.s32.totalorder %s20, 0
      %p107 = por %p105, %p106
      %p108 = scmp.ne.s32.totalorder %s94, %s95
      %p109 = scmp.eq.s32.totalorder %s21, 2
      %p110 = por %p108, %p109
      %p112 = scmp.ne.s32.totalorder %s95, %s111
      %p113 = scmp.eq.s32.totalorder %s21, 0
      %p114 = por %p112, %p113
      %p115 = scmp.le.s32.totalorder 1, %s15
      %p116 = scmp.lt.s32.totalorder %s15, 4
      %p117 = pnand %p115, %p116
      %p118 = pneg %p117
      // Predicated region
      $region9: #{tpu_custom_call.1} parent=5 // pred_check
        _
      $region10: #{tpu_custom_call.1} parent=5 // pred_check_branch
        %120 = sbr.rel (%p117) target = $region12
      $region11: #{tpu_custom_call.1} parent=5 // pred_region
        %s121 = ssub.s32 %s15, 1
        // Predicated region
        $region13: #{tpu_custom_call.1} parent=11 // pred_check
          %p122 = pneg %p53
        $region14: #{tpu_custom_call.1} parent=11 // pred_check_branch
          %124 = sbr.rel (%p122) target = $region16
        $region15: #{tpu_custom_call.1} parent=11 // pred_region
          %s125 = smul.u32 2, %s25
          %s127 = ssub.s32 128, 128
          %128 = vsyncadd [#allocation4], %s127
          %s129 = smul.addr %s125, 64
          %s130 = scalar_lea.hbm %s0, %s129
          %s132 = sshll.u32 [#allocation3], 4
          %s133 = int_to_ptr.vmem [resolvable:$true] %s132
          %135 = dma.hbm_to_vmem [thread:$0]  %s130, 128, %s133, [#allocation4]
        $region16: #{tpu_custom_call.1} parent=11 // pred_fallthru
          _
      $region12: #{tpu_custom_call.1} parent=5 // pred_fallthru
        _
      %p136 = scmp.lt.s32.totalorder %s15, 3
      // Predicated region
      $region17: #{tpu_custom_call.1} parent=5 // pred_check
        %p137 = pneg %p136
      $region18: #{tpu_custom_call.1} parent=5 // pred_check_branch
        %139 = sbr.rel (%p137) target = $region20
      $region19: #{tpu_custom_call.1} parent=5 // pred_region
        // Predicated region
        $region21: #{tpu_custom_call.1} parent=19 // pred_check
          %p140 = pneg %p75
        $region22: #{tpu_custom_call.1} parent=19 // pred_check_branch
          %142 = sbr.rel (%p140) target = $region24
        $region23: #{tpu_custom_call.1} parent=19 // pred_region
          %s143 = sand.u32 %s65, 1
          %s144 = scalar_lea.sflag [#allocation7], %s143
          %s145 = sand.u32 %s65, 1
          %s146 = smul.addr %s145, 2
          %s147 = scalar_lea.vmem [#allocation6], %s146
          %s148 = smul.u32 2, %s23
          %s150 = ssub.s32 32, 32
          %151 = vsyncadd %s144, %s150
          %s152 = smul.addr %s22, 2
          %s153 = sadd.s32 %s148, %s152
          %s154 = smul.addr %s153, 16
          %s155 = scalar_lea.hbm %s1, %s154
          %s157 = sshll.u32 %s147, 4
          %s158 = int_to_ptr.vmem [resolvable:$true] %s157
          %160 = dma.hbm_to_vmem [thread:$0]  %s155, 32, %s158, %s144
        $region24: #{tpu_custom_call.1} parent=19 // pred_fallthru
          _
      $region20: #{tpu_custom_call.1} parent=5 // pred_fallthru
        _
      %p161 = scmp.le.s32.totalorder 1, %s15
      %p162 = scmp.lt.s32.totalorder %s15, 4
      %p163 = pnand %p161, %p162
      %p164 = pneg %p163
      // Predicated region
      $region25: #{tpu_custom_call.1} parent=5 // pred_check
        _
      $region26: #{tpu_custom_call.1} parent=5 // pred_check_branch
        %166 = sbr.rel (%p163) target = $region28
      $region27: #{tpu_custom_call.1} parent=5 // pred_region
        %s167 = ssub.s32 %s15, 1
        // Predicated region
        $region29: #{tpu_custom_call.1} parent=27 // pred_check
          %p168 = pneg %p53
        $region30: #{tpu_custom_call.1} parent=27 // pred_check_branch
          %170 = sbr.rel (%p168) target = $region32
        $region31: #{tpu_custom_call.1} parent=27 // pred_region
          %171 = dma.done [#allocation4], 128
        $region32: #{tpu_custom_call.1} parent=27 // pred_fallthru
          _
        %s172 = sand.u32 %s68, 1
        %s173 = scalar_lea.sflag [#allocation7], %s172
        %s174 = sand.u32 %s68, 1
        %s175 = smul.addr %s174, 2
        %s176 = scalar_lea.vmem [#allocation6], %s175
        // Predicated region
        $region33: #{tpu_custom_call.1} parent=27 // pred_check
          %p177 = pneg %p81
        $region34: #{tpu_custom_call.1} parent=27 // pred_check_branch
          %179 = sbr.rel (%p177) target = $region36
        $region35: #{tpu_custom_call.1} parent=27 // pred_region
          %180 = dma.done %s173, 32
        $region36: #{tpu_custom_call.1} parent=27 // pred_fallthru
          _
        %p181 = pneg %p53
        %p182 = pneg %p50
        %s183 = sand.u32 %s68, 1
        %s184 = scalar_lea.sflag [#allocation7], %s183
        %s185 = sand.u32 %s68, 1
        %s186 = smul.addr %s185, 2
        %s187 = scalar_lea.vmem [#allocation6], %s186
        %p188 = pneg %p81
        %p189 = pneg %p78
        %p190 = pneg %p107
        %p191 = pneg %p104
        %s192 = sand.u32 %s94, 1
        %s193 = scalar_lea.sflag [#allocation5], %s192
        %s194 = sand.u32 %s94, 1
        %s195 = smul.addr %s194, 4
        %s196 = scalar_lea.vmem [#allocation8], %s195
        %s197 = smul.u32 2, %s25
        %s198 = smul.u32 2, %s25
        %p199 = scmp.eq.s32.totalorder %s25, 0
        // Predicated region
        $region37: #{tpu_custom_call.1} parent=27 // pred_check
          %p200 = pneg %p199
        $region38: #{tpu_custom_call.1} parent=27 // pred_check_branch
          %202 = sbr.rel (%p200) target = $region40
        $region39: #{tpu_custom_call.1} parent=27 // pred_region
          %vm203 = vcmask 27648
          %204 = vst.msk [vmem:[#allocation2] sm:$0xf] %vm203, 0.0
        $region40: #{tpu_custom_call.1} parent=27 // pred_fallthru
          _
        %v205 = vld [vmem:[#allocation3] sm:$0xff]
        %v206 = vld [vmem:[%s176] sm:$0x3]
        %v208 = vlaneseq
        %v209 = vshrl.u32 %v208, 7
        %v210 = vsub.s32 0, %v209
        %v211 = vrot.slane %v206, %v210
        %v212 = vlaneseq
        %v213 = vshrl.u32 %v212, 7
        %v214 = vsub.s32 1, %v213
        %v215 = vrot.slane %v206, %v214
        %v216 = vcombine.low %v211, %v215
        %v218 = vmul.f32 %v205, %v216
        %v219 = vld [vmem:[#allocation2] sm:$0xf]
        %v221 = vcombine.high %v218, %v218
        %223 = vmatprep.subr.mxu0 %v221
        %224 = vmatpush1.xpose.msra.mxu0 %v218
        %225 = vmatprep.subr.mxu0 0.0
        %226 = vmatpush1.xpose.msra.mxu0 0.0
        %227 = vmatprep.subr.mxu0 0.0
        %228 = vmatpush1.xpose.msra.mxu0 0.0
        %229 = vmatprep.subr.mxu0 0.0
        %230 = vmatpush1.xpose.msra.mxu0 0.0
        %231 = vmatprep.subr.mxu0 0.0
        %232 = vmatpush1.xpose.msra.mxu0 0.0
        %233 = vmatprep.subr.mxu0 0.0
        %234 = vmatpush1.xpose.msra.mxu0 0.0
        %235 = vmatprep.subr.mxu0 0.0
        %236 = vmatpush1.xpose.msra.mxu0 0.0
        %237 = vmatprep.subr.mxu0 0.0
        %238 = vmatpush1.xpose.msra.mxu0 0.0
        %239 = vmatprep.subr.mxu0 0.0
        %240 = vmatpush1.xpose.msra.mxu0 0.0
        %241 = vmatprep.subr.mxu0 0.0
        %242 = vmatpush1.xpose.msra.mxu0 0.0
        %243 = vmatprep.subr.mxu0 0.0
        %244 = vmatpush1.xpose.msra.mxu0 0.0
        %245 = vmatprep.subr.mxu0 0.0
        %246 = vmatpush1.xpose.msra.mxu0 0.0
        %247 = vmatprep.subr.mxu0 0.0
        %248 = vmatpush1.xpose.msra.mxu0 0.0
        %249 = vmatprep.subr.mxu0 0.0
        %250 = vmatpush1.xpose.msra.mxu0 0.0
        %251 = vmatprep.subr.mxu0 0.0
        %252 = vmatpush1.xpose.msra.mxu0 0.0
        %253 = vmatprep.subr.mxu0 0.0
        %254 = vmatpush1.xpose.msra.mxu0 0.0
        %255 = vmatprep.subr.mxu0 0.0
        %256 = vmatpush1.xpose.msra.mxu0 0.0
        %257 = vmatprep.subr.mxu0 0.0
        %258 = vmatpush1.xpose.msra.mxu0 0.0
        %259 = vmatprep.subr.mxu0 0.0
        %260 = vmatpush1.xpose.msra.mxu0 0.0
        %261 = vmatprep.subr.mxu0 0.0
        %262 = vmatpush1.xpose.msra.mxu0 0.0
        %263 = vmatprep.subr.mxu0 0.0
        %264 = vmatpush1.xpose.msra.mxu0 0.0
        %265 = vmatprep.subr.mxu0 0.0
        %266 = vmatpush1.xpose.msra.mxu0 0.0
        %267 = vmatprep.subr.mxu0 0.0
        %268 = vmatpush1.xpose.msra.mxu0 0.0
        %269 = vmatprep.subr.mxu0 0.0
        %270 = vmatpush1.xpose.msra.mxu0 0.0
        %271 = vmatprep.subr.mxu0 0.0
        %272 = vmatpush1.xpose.msra.mxu0 0.0
        %273 = vmatprep.subr.mxu0 0.0
        %274 = vmatpush1.xpose.msra.mxu0 0.0
        %275 = vmatprep.subr.mxu0 0.0
        %276 = vmatpush1.xpose.msra.mxu0 0.0
        %277 = vmatprep.subr.mxu0 0.0
        %278 = vmatpush1.xpose.msra.mxu0 0.0
        %279 = vmatprep.subr.mxu0 0.0
        %280 = vmatpush1.xpose.msra.mxu0 0.0
        %281 = vmatprep.subr.mxu0 0.0
        %282 = vmatpush1.xpose.msra.mxu0 0.0
        %283 = vmatprep.subr.mxu0 0.0
        %284 = vmatpush1.xpose.msra.mxu0 0.0
        %285 = vmatprep.subr.mxu0 0.0
        %286 = vmatpush1.xpose.msra.mxu0 0.0
        %287 = vmatprep.mubr.f32.mxu0 %v221
        %288 = vmatmul.mubr.f32.gmra.mrb[0].mxu0 %v218
        %v289 = vpop.f32.mrb[0].mxu0
        %v290 = vadd.f32 0.0, %v289
        %v291 = vpop.f32.mrb[0].mxu0
        %292 = vdwg.mxu0
        %v293 = vadd.f32 %v219, %v290
        %vm294 = vcmask 27648
        %295 = vst.msk [vmem:[#allocation2] sm:$0xf] %vm294, %v293
        // Predicated region
        $region41: #{tpu_custom_call.1} parent=27 // pred_check
          %p296 = pneg %p199
        $region42: #{tpu_custom_call.1} parent=27 // pred_check_branch
          %298 = sbr.rel (%p296) target = $region44
        $region43: #{tpu_custom_call.1} parent=27 // pred_region
          %v299 = vld [vmem:[#allocation2] sm:$0xf]
          %300 = vst.msk [vmem:[%s196] sm:$0xf] %vm294, %v299
        $region44: #{tpu_custom_call.1} parent=27 // pred_fallthru
          _
        %s301 = sand.u32 %s94, 1
        %s302 = scalar_lea.sflag [#allocation5], %s301
        %s303 = sand.u32 %s94, 1
        %s304 = smul.addr %s303, 4
        %s305 = scalar_lea.vmem [#allocation8], %s304
        // Predicated region
        $region45: #{tpu_custom_call.1} parent=27 // pred_check
          %p306 = pneg %p104
        $region46: #{tpu_custom_call.1} parent=27 // pred_check_branch
          %308 = sbr.rel (%p306) target = $region48
        $region47: #{tpu_custom_call.1} parent=27 // pred_region
          %s310 = ssub.s32 64, 64
          %311 = vsyncadd %s302, %s310
          %s312 = smul.addr %s24, 64
          %s313 = scalar_lea.hbm %s2, %s312
          %s315 = sshll.u32 %s305, 4
          %s316 = int_to_ptr.vmem [resolvable:$true] %s315
          %318 = dma.vmem_to_hbm [thread:$0]  %s316, 64, %s313, %s302
        $region48: #{tpu_custom_call.1} parent=27 // pred_fallthru
          _
      $region28: #{tpu_custom_call.1} parent=5 // pred_fallthru
        _
      %p319 = scmp.le.s32.totalorder 2, %s15
      // Predicated region
      $region49: #{tpu_custom_call.1} parent=5 // pred_check
        %p320 = pneg %p319
      $region50: #{tpu_custom_call.1} parent=5 // pred_check_branch
        %322 = sbr.rel (%p320) target = $region52
      $region51: #{tpu_custom_call.1} parent=5 // pred_region
        %s323 = ssub.s32 %s15, 2
        // Predicated region
        $region53: #{tpu_custom_call.1} parent=51 // pred_check
          %p324 = pneg %p110
        $region54: #{tpu_custom_call.1} parent=51 // pred_check_branch
          %326 = sbr.rel (%p324) target = $region56
        $region55: #{tpu_custom_call.1} parent=51 // pred_region
          %s327 = sand.u32 %s95, 1
          %s328 = scalar_lea.sflag [#allocation5], %s327
          %s329 = sand.u32 %s95, 1
          %s330 = smul.addr %s329, 4
          %s331 = scalar_lea.vmem [#allocation8], %s330
          %332 = dma.done %s328, 64
        $region56: #{tpu_custom_call.1} parent=51 // pred_fallthru
          _
      $region52: #{tpu_custom_call.1} parent=5 // pred_fallthru
        _
    $region6: #{tpu_custom_call.1} parent=1 // loop_footer
      %s19 = sadd.s32 1, %s15
    $region7: #{tpu_custom_call.1} parent=1 // loop_footer_branch
      %14 = sbr.rel target = $region3
    $region8: #{tpu_custom_call.1} parent=1 // loop_exit
      _
    %333 = vsyncpa [#allocation4], 1
    %s334 = scalar_lea.sflag [#allocation4], 1
    %335 = vsyncpa %s334, 1
    %336 = vsyncpa [#allocation7], 1
    %s337 = scalar_lea.sflag [#allocation7], 1
    %338 = vsyncpa %s337, 1
    %339 = vsyncpa [#allocation5], 1
    %s340 = scalar_lea.sflag [#allocation5], 1
    %341 = vsyncpa %s340, 1

</llo_original>
